<compile_context>
chip_gen: v7x
topology: tpu7x:2x2x1
jax: 0.10.0
libtpu: 0.0.40
codegen_flags: <defaults>
</compile_context>

<pallas_src>
import functools

import jax
import jax.numpy as jnp
from jax.experimental import pallas as pl
from jax.experimental.pallas import tpu as pltpu

HIDDEN_PAD = 128   # lane-dense padding for the hidden dim (logical 50)
OUT_PAD = 128      # lane-dense padding for the action dim (logical 3)


def _mlp_argmax_kernel(x_ref, w1_ref, w23_ref, b_ref,
                       q_ref, act_ref, maxq_ref, *, out_n):
    x = x_ref[...]                      # (B, in_n)
    w1 = w1_ref[...]                    # (in_n, HIDDEN_PAD)
    b1 = b_ref[0:1, :]                  # (1, HIDDEN_PAD)
    b2 = b_ref[1:2, :]
    b3 = b_ref[2:3, :]

    # Layer 1: contraction dim (in_n == 2) is tiny -> unrolled VPU FMA,
    # avoids paying MXU push/pop latency for 2 useful rows.
    h1 = x[:, 0:1] * w1[0:1, :] + b1
    for i in range(1, x.shape[1]):      # static unroll (in_n is tiny)
        h1 = h1 + x[:, i:i + 1] * w1[i:i + 1, :]
    h1 = jnp.maximum(h1, 0.0)

    # Layers 2 & 3 on the MXU (128x128 padded, zero-padded rows/cols are exact).
    h2 = jnp.maximum(
        jnp.dot(h1, w23_ref[0], preferred_element_type=jnp.float32) + b2, 0.0)
    q = jnp.dot(h2, w23_ref[1], preferred_element_type=jnp.float32) + b3

    # Lane-dense (B, 128) store of the padded Q slab.
    q_ref[...] = q.astype(q_ref.dtype)

    # Fused greedy-action / max-Q over the logical out_n lanes.
    lane = jax.lax.broadcasted_iota(jnp.int32, q.shape, 1)
    valid = lane < out_n
    q_m = jnp.where(valid, q, -jnp.inf)
    max_q = jnp.max(q_m, axis=1, keepdims=True)
    is_max = jnp.logical_and(valid, q_m == max_q)
    # first index achieving the max -> matches torch.argmax / jnp.argmax ties
    arg = jnp.min(jnp.where(is_max, lane, jnp.int32(q.shape[1])),
                  axis=1, keepdims=True)
    maxq_ref[...] = max_q
    act_ref[...] = arg


@functools.partial(jax.jit, static_argnums=(2,))
def net_forward(x, packed_params, out_n):
    """Pallas implementation of Net.forward.

    Returns (q_values, greedy_actions, max_q) — the contents of
    pfrl.action_value.DiscreteActionValue(q_values).
    """
    # TODO(synk): pfrl's DiscreteActionValue is a plain Python container
    # (no tensor compute); we return its derived quantities directly.
    w1p, w23, bp = packed_params
    batch = x.shape[0]
    b_pad = -(-batch // 8) * 8          # sublane-align the batch
    if b_pad != batch:
        x = jnp.pad(x, ((0, b_pad - batch), (0, 0)))

    kernel = functools.partial(_mlp_argmax_kernel, out_n=out_n)
    q_pad, act, maxq = pl.pallas_call(
        kernel,
        out_shape=(
            jax.ShapeDtypeStruct((b_pad, OUT_PAD), jnp.float32),
            jax.ShapeDtypeStruct((b_pad, 1), jnp.int32),
            jax.ShapeDtypeStruct((b_pad, 1), jnp.float32),
        ),
        in_specs=[pl.BlockSpec(memory_space=pltpu.MemorySpace.VMEM)] * 4,
        out_specs=(pl.BlockSpec(memory_space=pltpu.MemorySpace.VMEM),) * 3,
    )(x, w1p, w23, bp)

    q_values = q_pad[:batch, :out_n]
    greedy_actions = act[:batch, 0]
    max_q = maxq[:batch, 0]
    return q_values, greedy_actions, max_q


def init_params(key, input_n, output_n, hidden=50):
    """PyTorch nn.Linear default init (U[-1/sqrt(fan_in), 1/sqrt(fan_in)]).
    Weights are stored pre-transposed as (in, out) so the kernel computes
    y = x @ W + b, matching PyTorch's y = x @ W^T + b."""
    def linear(k, fan_in, fan_out):
        kw, kb = jax.random.split(k)
        bound = 1.0 / jnp.sqrt(float(fan_in))
        w = jax.random.uniform(kw, (fan_in, fan_out), jnp.float32, -bound, bound)
        b = jax.random.uniform(kb, (fan_out,), jnp.float32, -bound, bound)
        return w, b

    k1, k2, k3 = jax.random.split(key, 3)
    w1, b1 = linear(k1, input_n, hidden)
    w2, b2 = linear(k2, hidden, hidden)
    w3, b3 = linear(k3, hidden, output_n)
    return (w1, b1, w2, b2, w3, b3)


def pack_params(w1, b1, w2, b2, w3, b3):
    """Zero-pad to lane-dense 128-wide buffers and pack into 3 arrays
    (fewer DMA descriptors). Zero padding keeps q / argmax / max exact
    because padded lanes are masked inside the kernel."""
    in_n, hidden = w1.shape
    out_n = w3.shape[1]
    w1p = jnp.zeros((in_n, HIDDEN_PAD), jnp.float32).at[:, :hidden].set(w1)
    w2p = jnp.zeros((HIDDEN_PAD, HIDDEN_PAD), jnp.float32).at[:hidden, :hidden].set(w2)
    w3p = jnp.zeros((HIDDEN_PAD, OUT_PAD), jnp.float32).at[:hidden, :out_n].set(w3)
    w23 = jnp.stack([w2p, w3p], axis=0)                      # (2, 128, 128)
    bp = jnp.zeros((3, HIDDEN_PAD), jnp.float32)
    bp = bp.at[0, :hidden].set(b1).at[1, :hidden].set(b2).at[2, :out_n].set(b3)
    return (w1p, w23, bp)


if __name__ == "__main__":
    # MountainCar-v0: observation dim = 2, discrete actions = 3.
    input_n, output_n, batch = 2, 3, 8

    key = jax.random.PRNGKey(0)
    k_params, k_x = jax.random.split(key)
    w1, b1, w2, b2, w3, b3 = init_params(k_params, input_n, output_n)
    packed = pack_params(w1, b1, w2, b2, w3, b3)
    x = jax.random.normal(k_x, (batch, input_n), dtype=jnp.float32)

    q_values, greedy_actions, max_q = net_forward(x, packed, output_n)
    jax.block_until_ready((q_values, greedy_actions, max_q))

    assert q_values.shape == (batch, output_n)
    assert greedy_actions.shape == (batch,)
    assert max_q.shape == (batch,)

    # Pure-JAX reference check (same math as the PyTorch module).
    h1 = jnp.maximum(x @ w1 + b1, 0.0)
    h2 = jnp.maximum(h1 @ w2 + b2, 0.0)
    q_exp = h2 @ w3 + b3
    assert jnp.allclose(q_values, q_exp, atol=1e-5), "q mismatch"
    assert jnp.array_equal(greedy_actions, jnp.argmax(q_exp, axis=-1)), "argmax mismatch"
    assert jnp.allclose(max_q, jnp.max(q_exp, axis=-1), atol=1e-5), "max mismatch"

    print("KERNEL_OK")
</pallas_src>

<mosaic_0001>
module attributes {stable_mosaic.version = 11 : i64} {
  func.func @_mlp_argmax_kernel(%arg0: memref<8x2xf32, #tpu.memory_space<vmem>>, %arg1: memref<2x128xf32, #tpu.memory_space<vmem>>, %arg2: memref<2x128x128xf32, #tpu.memory_space<vmem>>, %arg3: memref<3x128xf32, #tpu.memory_space<vmem>>, %arg4: memref<8x128xf32, #tpu.memory_space<vmem>>, %arg5: memref<8x1xi32, #tpu.memory_space<vmem>>, %arg6: memref<8x1xf32, #tpu.memory_space<vmem>>) attributes {dimension_semantics = [], scalar_prefetch = 0 : i64, scratch_operands = 0 : i64, tpu.core_type = #tpu.core_type<tc>} {
    %c0 = arith.constant 0 : index
    %c0_0 = arith.constant 0 : index
    %0 = vector.load %arg0[%c0, %c0_0] : memref<8x2xf32, #tpu.memory_space<vmem>>, vector<8x2xf32>
    %c0_1 = arith.constant 0 : index
    %c0_2 = arith.constant 0 : index
    %1 = vector.load %arg1[%c0_1, %c0_2] : memref<2x128xf32, #tpu.memory_space<vmem>>, vector<2x128xf32>
    %c0_3 = arith.constant 0 : index
    %c0_4 = arith.constant 0 : index
    %2 = vector.load %arg3[%c0_3, %c0_4] : memref<3x128xf32, #tpu.memory_space<vmem>>, vector<1x128xf32>
    %c1 = arith.constant 1 : index
    %c0_5 = arith.constant 0 : index
    %3 = vector.load %arg3[%c1, %c0_5] : memref<3x128xf32, #tpu.memory_space<vmem>>, vector<1x128xf32>
    %c2 = arith.constant 2 : index
    %c0_6 = arith.constant 0 : index
    %4 = vector.load %arg3[%c2, %c0_6] : memref<3x128xf32, #tpu.memory_space<vmem>>, vector<1x128xf32>
    %5 = vector.extract_strided_slice %0 {offsets = [0, 0], sizes = [8, 1], strides = [1, 1]} : vector<8x2xf32> to vector<8x1xf32>
    %6 = vector.extract_strided_slice %1 {offsets = [0, 0], sizes = [1, 128], strides = [1, 1]} : vector<2x128xf32> to vector<1x128xf32>
    %7 = vector.broadcast %5 : vector<8x1xf32> to vector<8x128xf32>
    %8 = vector.broadcast %6 : vector<1x128xf32> to vector<8x128xf32>
    %9 = arith.mulf %7, %8 : vector<8x128xf32>
    %10 = vector.broadcast %2 : vector<1x128xf32> to vector<8x128xf32>
    %11 = arith.addf %9, %10 : vector<8x128xf32>
    %12 = vector.extract_strided_slice %0 {offsets = [0, 1], sizes = [8, 1], strides = [1, 1]} : vector<8x2xf32> to vector<8x1xf32>
    %13 = vector.extract_strided_slice %1 {offsets = [1, 0], sizes = [1, 128], strides = [1, 1]} : vector<2x128xf32> to vector<1x128xf32>
    %14 = vector.broadcast %12 : vector<8x1xf32> to vector<8x128xf32>
    %15 = vector.broadcast %13 : vector<1x128xf32> to vector<8x128xf32>
    %16 = arith.mulf %14, %15 : vector<8x128xf32>
    %17 = arith.addf %11, %16 : vector<8x128xf32>
    %cst = arith.constant 0.000000e+00 : f32
    %18 = vector.broadcast %cst : f32 to vector<8x128xf32>
    %19 = arith.maximumf %17, %18 : vector<8x128xf32>
    %c0_7 = arith.constant 0 : index
    %c0_8 = arith.constant 0 : index
    %c0_9 = arith.constant 0 : index
    %20 = vector.load %arg2[%c0_7, %c0_8, %c0_9] : memref<2x128x128xf32, #tpu.memory_space<vmem>>, vector<1x128x128xf32>
    %21 = vector.shape_cast %20 : vector<1x128x128xf32> to vector<128x128xf32>
    %cst_10 = arith.constant dense<0.000000e+00> : vector<8x128xf32>
    %22 = tpu.matmul %19, %21, %cst_10 {dimension_numbers = #tpu.dot_dimension_numbers<[1], [0], [0], [1], [0, 0, 1, 1], [], []>} : vector<8x128xf32>, vector<128x128xf32>, vector<8x128xf32> -> vector<8x128xf32>
    %23 = vector.broadcast %3 : vector<1x128xf32> to vector<8x128xf32>
    %24 = arith.addf %22, %23 : vector<8x128xf32>
    %cst_11 = arith.constant 0.000000e+00 : f32
    %25 = vector.broadcast %cst_11 : f32 to vector<8x128xf32>
    %26 = arith.maximumf %24, %25 : vector<8x128xf32>
    %c1_12 = arith.constant 1 : index
    %c0_13 = arith.constant 0 : index
    %c0_14 = arith.constant 0 : index
    %27 = vector.load %arg2[%c1_12, %c0_13, %c0_14] : memref<2x128x128xf32, #tpu.memory_space<vmem>>, vector<1x128x128xf32>
    %28 = vector.shape_cast %27 : vector<1x128x128xf32> to vector<128x128xf32>
    %cst_15 = arith.constant dense<0.000000e+00> : vector<8x128xf32>
    %29 = tpu.matmul %26, %28, %cst_15 {dimension_numbers = #tpu.dot_dimension_numbers<[1], [0], [0], [1], [0, 0, 1, 1], [], []>} : vector<8x128xf32>, vector<128x128xf32>, vector<8x128xf32> -> vector<8x128xf32>
    %30 = vector.broadcast %4 : vector<1x128xf32> to vector<8x128xf32>
    %31 = arith.addf %29, %30 : vector<8x128xf32>
    %c0_16 = arith.constant 0 : index
    %c0_17 = arith.constant 0 : index
    %32 = vector.load %arg4[%c0_16, %c0_17] : memref<8x128xf32, #tpu.memory_space<vmem>>, vector<8x128xf32>
    tpu.vector_store %arg4[%c0_16, %c0_17], %31 {strides = array<i32>} : memref<8x128xf32, #tpu.memory_space<vmem>>, vector<8x128xf32>,
    %33 = tpu.iota {dimensions = array<i32: 1>} : vector<8x128xi32>
    %c3_i32 = arith.constant 3 : i32
    %34 = vector.broadcast %c3_i32 : i32 to vector<8x128xi32>
    %35 = arith.cmpi slt, %33, %34 : vector<8x128xi32>
    %cst_18 = arith.constant 0xFF800000 : f32
    %36 = vector.broadcast %cst_18 : f32 to vector<8x128xf32>
    %37 = arith.select %35, %31, %36 : vector<8x128xi1>, vector<8x128xf32>
    %cst_19 = arith.constant dense<0xFF800000> : vector<8xf32>
    %38 = vector.multi_reduction <maximumf>, %37, %cst_19 [1] : vector<8x128xf32> to vector<8xf32>
    %39 = vector.shape_cast %38 : vector<8xf32> to vector<8x1xf32>
    %40 = vector.broadcast %39 : vector<8x1xf32> to vector<8x128xf32>
    %41 = arith.cmpf oeq, %37, %40 : vector<8x128xf32>
    %42 = arith.andi %35, %41 : vector<8x128xi1>
    %c128_i32 = arith.constant 128 : i32
    %43 = vector.broadcast %c128_i32 : i32 to vector<8x128xi32>
    %44 = arith.select %42, %33, %43 : vector<8x128xi1>, vector<8x128xi32>
    %cst_20 = arith.constant dense<2147483647> : vector<8xi32>
    %45 = vector.multi_reduction <minsi>, %44, %cst_20 [1] : vector<8x128xi32> to vector<8xi32>
    %46 = vector.shape_cast %45 : vector<8xi32> to vector<8x1xi32>
    %c0_21 = arith.constant 0 : index
    %c0_22 = arith.constant 0 : index
    %47 = vector.load %arg6[%c0_21, %c0_22] : memref<8x1xf32, #tpu.memory_space<vmem>>, vector<8x1xf32>
    tpu.vector_store %arg6[%c0_21, %c0_22], %39 {strides = array<i32>} : memref<8x1xf32, #tpu.memory_space<vmem>>, vector<8x1xf32>,
    %c0_23 = arith.constant 0 : index
    %c0_24 = arith.constant 0 : index
    %48 = vector.load %arg5[%c0_23, %c0_24] : memref<8x1xi32, #tpu.memory_space<vmem>>, vector<8x1xi32>
    tpu.vector_store %arg5[%c0_23, %c0_24], %46 {strides = array<i32>} : memref<8x1xi32, #tpu.memory_space<vmem>>, vector<8x1xi32>,
    return
  }
}

</mosaic_0001>

<llo_original>
// kernel: net_forward.1
$region0: #{net_forward.1}
  #allocation0 [shape = 'u32[]', space=smem, size = 0x4, offset = 0x4, fixed_abs, tag = 'smem constant byte address 0x4 - core index']
  #allocation1 [shape = 'u32[144,128]{1,0:T(1,128)}', space=vmem, size = 0x12000, scoped, tag = 'internal scratch']
  %s0 = inlined_call_operand.vmem [shape: f32[8,2], index: 0, kind: input, shape index: {}]
  %s1 = inlined_call_operand.vmem [shape: f32[2,128], index: 1, kind: input, shape index: {}]
  %s2 = inlined_call_operand.hbm [shape: f32[2,128,128], index: 2, kind: input, shape index: {}]
  %s3 = inlined_call_operand.vmem [shape: f32[3,128], index: 3, kind: input, shape index: {}]
  %s4 = inlined_call_operand.vmem [shape: f32[8,128], index: 4, kind: output, shape index: {0}]
  %s5 = inlined_call_operand.vmem [shape: s32[8,1], index: 5, kind: output, shape index: {1}]
  %s6 = inlined_call_operand.vmem [shape: f32[8,1], index: 6, kind: output, shape index: {2}]
  %7 = xla_tuple %s4, %s5, %s6
  %s8 = sld [smem:[#allocation0]]
  $region46: #{net_forward.1} parent=0
    _
  %s10 = ssub.s32 1, %s8
  %s11 = scalar_select 0, %s10, %s8
  $region1: #{net_forward.1} parent=0
    #allocation2 [shape = 'u8[131072]{0}', space=vmem, size = 0x20000, scoped, tag = 'input window, operand 2, single buffered']
    #allocation3 [shape = 's32[1]{0}', space=sflag, size = 0x4, scoped, tag = 'scoped memory for net_forward.1']
    %12 = vsyncpa [#allocation3], 0
    // Predicated region
    $region2: #{net_forward.1} parent=1 // pred_check
      _
    $region3: #{net_forward.1} parent=1 // pred_check_branch
      %14 = sbr.rel (0) target = $region5
    $region4: #{net_forward.1} parent=1 // pred_region
      _
    $region5: #{net_forward.1} parent=1 // pred_fallthru
      _
    // Predicated region
    $region6: #{net_forward.1} parent=1 // pred_check
      _
    $region7: #{net_forward.1} parent=1 // pred_check_branch
      %16 = sbr.rel (0) target = $region9
    $region8: #{net_forward.1} parent=1 // pred_region
      _
    $region9: #{net_forward.1} parent=1 // pred_fallthru
      _
    // Predicated region
    $region10: #{net_forward.1} parent=1 // pred_check
      _
    $region11: #{net_forward.1} parent=1 // pred_check_branch
      %18 = sbr.rel (0) target = $region13
    $region12: #{net_forward.1} parent=1 // pred_region
      %s20 = ssub.s32 4096, 4096
      %21 = vsyncadd [#allocation3], %s20
      %s22 = sshll.u32 [#allocation2], 4
      %s23 = int_to_ptr.vmem [resolvable:$true] %s22
      %28 = dma.hbm_to_vmem [thread:$0]  %s2, 4096, %s23, [#allocation3], 128, 128, 8
    $region13: #{net_forward.1} parent=1 // pred_fallthru
      _
    // Predicated region
    $region14: #{net_forward.1} parent=1 // pred_check
      _
    $region15: #{net_forward.1} parent=1 // pred_check_branch
      %30 = sbr.rel (0) target = $region17
    $region16: #{net_forward.1} parent=1 // pred_region
      _
    $region17: #{net_forward.1} parent=1 // pred_fallthru
      _
    // Predicated region
    $region18: #{net_forward.1} parent=1 // pred_check
      _
    $region19: #{net_forward.1} parent=1 // pred_check_branch
      %32 = sbr.rel (0) target = $region21
    $region20: #{net_forward.1} parent=1 // pred_region
      %33 = dma.done [#allocation3], 4096
    $region21: #{net_forward.1} parent=1 // pred_fallthru
      _
    %v34 = vld [vmem:[%s0] sm:$0xff]
    %v35 = vld [vmem:[%s1] sm:$0x3]
    %v36 = vld [vmem:[%s3] sm:$0x1]
    %v37 = vld [vmem:[%s3 + $0x1] sm:$0x1]
    %v38 = vld [vmem:[%s3 + $0x2] sm:$0x1]
    %40 = vset.pattern.permute.xlu0 0
    %41 = vperm.xlu0 %40, %v34
    %v42 = vpop.permute.xlu0 %41
    %v44 = vlaneseq
    %v45 = vshrl.u32 %v44, 7
    %v46 = vsub.s32 0, %v45
    %v47 = vrot.slane %v35, %v46
    %v48 = vmul.f32 %v42, %v47
    %v49 = vlaneseq
    %v50 = vshrl.u32 %v49, 7
    %v51 = vsub.s32 0, %v50
    %v52 = vrot.slane %v36, %v51
    %v53 = vadd.f32 %v48, %v52
    %54 = vset.pattern.permute.xlu0 1
    %55 = vperm.xlu0 %54, %v34
    %v56 = vpop.permute.xlu0 %55
    %v58 = vlaneseq
    %v59 = vshrl.u32 %v58, 7
    %v60 = vsub.s32 1, %v59
    %v61 = vrot.slane %v35, %v60
    %v62 = vmul.f32 %v56, %v61
    %v63 = vadd.f32 %v53, %v62
    %v64 = vmax.f32 %v63, 0.0
    %v65 = vld [vmem:[#allocation2] sm:$0xff]
    %v66 = vld [vmem:[#allocation2 + $0x8] sm:$0xff]
    %v67 = vld [vmem:[#allocation2 + $0x10] sm:$0xff]
    %v68 = vld [vmem:[#allocation2 + $0x18] sm:$0xff]
    %v69 = vld [vmem:[#allocation2 + $0x20] sm:$0xff]
    %v70 = vld [vmem:[#allocation2 + $0x28] sm:$0xff]
    %v71 = vld [vmem:[#allocation2 + $0x30] sm:$0xff]
    %v72 = vld [vmem:[#allocation2 + $0x38] sm:$0xff]
    %v73 = vld [vmem:[#allocation2 + $0x40] sm:$0xff]
    %v74 = vld [vmem:[#allocation2 + $0x48] sm:$0xff]
    %v75 = vld [vmem:[#allocation2 + $0x50] sm:$0xff]
    %v76 = vld [vmem:[#allocation2 + $0x58] sm:$0xff]
    %v77 = vld [vmem:[#allocation2 + $0x60] sm:$0xff]
    %v78 = vld [vmem:[#allocation2 + $0x68] sm:$0xff]
    %v79 = vld [vmem:[#allocation2 + $0x70] sm:$0xff]
    %v80 = vld [vmem:[#allocation2 + $0x78] sm:$0xff]
    %v81 = vlaneseq
    %v82 = vshrl.u32 %v81, 7
    %v83 = vsub.s32 0, %v82
    %v84 = vrot.slane %v37, %v83
    %85 = vmatprep.subr.mxu0 0.0
    %86 = vmatpush1.msra.mxu0 %v65
    %87 = vmatprep.subr.mxu0 0.0
    %88 = vmatpush1.msra.mxu0 %v66
    %89 = vmatprep.subr.mxu0 0.0
    %90 = vmatpush1.msra.mxu0 %v67
    %91 = vmatprep.subr.mxu0 0.0
    %92 = vmatpush1.msra.mxu0 %v68
    %93 = vmatprep.subr.mxu0 0.0
    %94 = vmatpush1.msra.mxu0 %v69
    %95 = vmatprep.subr.mxu0 0.0
    %96 = vmatpush1.msra.mxu0 %v70
    %97 = vmatprep.subr.mxu0 0.0
    %98 = vmatpush1.msra.mxu0 %v71
    %99 = vmatprep.subr.mxu0 0.0
    %100 = vmatpush1.msra.mxu0 %v72
    %101 = vmatprep.subr.mxu0 0.0
    %102 = vmatpush1.msra.mxu0 %v73
    %103 = vmatprep.subr.mxu0 0.0
    %104 = vmatpush1.msra.mxu0 %v74
    %105 = vmatprep.subr.mxu0 0.0
    %106 = vmatpush1.msra.mxu0 %v75
    %107 = vmatprep.subr.mxu0 0.0
    %108 = vmatpush1.msra.mxu0 %v76
    %109 = vmatprep.subr.mxu0 0.0
    %110 = vmatpush1.msra.mxu0 %v77
    %111 = vmatprep.subr.mxu0 0.0
    %112 = vmatpush1.msra.mxu0 %v78
    %113 = vmatprep.subr.mxu0 0.0
    %114 = vmatpush1.msra.mxu0 %v79
    %115 = vmatprep.subr.mxu0 0.0
    %116 = vmatpush1.msra.mxu0 %v80
    %117 = vmatprep.subr.mxu0 0.0
    %118 = vmatpush1.msra.mxu0 0.0
    %119 = vmatprep.subr.mxu0 0.0
    %120 = vmatpush1.msra.mxu0 0.0
    %121 = vmatprep.subr.mxu0 0.0
    %122 = vmatpush1.msra.mxu0 0.0
    %123 = vmatprep.subr.mxu0 0.0
    %124 = vmatpush1.msra.mxu0 0.0
    %125 = vmatprep.subr.mxu0 0.0
    %126 = vmatpush1.msra.mxu0 0.0
    %127 = vmatprep.subr.mxu0 0.0
    %128 = vmatpush1.msra.mxu0 0.0
    %129 = vmatprep.subr.mxu0 0.0
    %130 = vmatpush1.msra.mxu0 0.0
    %131 = vmatprep.subr.mxu0 0.0
    %132 = vmatpush1.msra.mxu0 0.0
    %133 = vmatprep.subr.mxu0 0.0
    %134 = vmatpush1.msra.mxu0 0.0
    %135 = vmatprep.subr.mxu0 0.0
    %136 = vmatpush1.msra.mxu0 0.0
    %137 = vmatprep.subr.mxu0 0.0
    %138 = vmatpush1.msra.mxu0 0.0
    %139 = vmatprep.subr.mxu0 0.0
    %140 = vmatpush1.msra.mxu0 0.0
    %141 = vmatprep.subr.mxu0 0.0
    %142 = vmatpush1.msra.mxu0 0.0
    %143 = vmatprep.subr.mxu0 0.0
    %144 = vmatpush1.msra.mxu0 0.0
    %145 = vmatprep.subr.mxu0 0.0
    %146 = vmatpush1.msra.mxu0 0.0
    %147 = vmatprep.subr.mxu0 0.0
    %148 = vmatpush1.msra.mxu0 0.0
    %149 = vmatprep.mubr.f32.mxu0 0.0
    %150 = vmatmul.mubr.f32.gmra.mrb[0].mxu0 %v64
    %v151 = vpop.f32.mrb[0].mxu0
    %v152 = vadd.f32 %v84, %v151
    %v153 = vpop.f32.mrb[0].mxu0
    %154 = vdwg.mxu0
    %v155 = vmax.f32 %v152, 0.0
    %s156 = scalar_lea.vmem [#allocation2], 128
    %v157 = vld [vmem:[%s156] sm:$0xff]
    %v158 = vld [vmem:[%s156 + $0x8] sm:$0xff]
    %v159 = vld [vmem:[%s156 + $0x10] sm:$0xff]
    %v160 = vld [vmem:[%s156 + $0x18] sm:$0xff]
    %v161 = vld [vmem:[%s156 + $0x20] sm:$0xff]
    %v162 = vld [vmem:[%s156 + $0x28] sm:$0xff]
    %v163 = vld [vmem:[%s156 + $0x30] sm:$0xff]
    %v164 = vld [vmem:[%s156 + $0x38] sm:$0xff]
    %v165 = vld [vmem:[%s156 + $0x40] sm:$0xff]
    %v166 = vld [vmem:[%s156 + $0x48] sm:$0xff]
    %v167 = vld [vmem:[%s156 + $0x50] sm:$0xff]
    %v168 = vld [vmem:[%s156 + $0x58] sm:$0xff]
    %v169 = vld [vmem:[%s156 + $0x60] sm:$0xff]
    %v170 = vld [vmem:[%s156 + $0x68] sm:$0xff]
    %v171 = vld [vmem:[%s156 + $0x70] sm:$0xff]
    %v172 = vld [vmem:[%s156 + $0x78] sm:$0xff]
    %v173 = vlaneseq
    %v174 = vshrl.u32 %v173, 7
    %v175 = vsub.s32 0, %v174
    %v176 = vrot.slane %v38, %v175
    %177 = vmatprep.subr.mxu0 0.0
    %178 = vmatpush1.msra.mxu0 %v157
    %179 = vmatprep.subr.mxu0 0.0
    %180 = vmatpush1.msra.mxu0 %v158
    %181 = vmatprep.subr.mxu0 0.0
    %182 = vmatpush1.msra.mxu0 %v159
    %183 = vmatprep.subr.mxu0 0.0
    %184 = vmatpush1.msra.mxu0 %v160
    %185 = vmatprep.subr.mxu0 0.0
    %186 = vmatpush1.msra.mxu0 %v161
    %187 = vmatprep.subr.mxu0 0.0
    %188 = vmatpush1.msra.mxu0 %v162
    %189 = vmatprep.subr.mxu0 0.0
    %190 = vmatpush1.msra.mxu0 %v163
    %191 = vmatprep.subr.mxu0 0.0
    %192 = vmatpush1.msra.mxu0 %v164
    %193 = vmatprep.subr.mxu0 0.0
    %194 = vmatpush1.msra.mxu0 %v165
    %195 = vmatprep.subr.mxu0 0.0
    %196 = vmatpush1.msra.mxu0 %v166
    %197 = vmatprep.subr.mxu0 0.0
    %198 = vmatpush1.msra.mxu0 %v167
    %199 = vmatprep.subr.mxu0 0.0
    %200 = vmatpush1.msra.mxu0 %v168
    %201 = vmatprep.subr.mxu0 0.0
    %202 = vmatpush1.msra.mxu0 %v169
    %203 = vmatprep.subr.mxu0 0.0
    %204 = vmatpush1.msra.mxu0 %v170
    %205 = vmatprep.subr.mxu0 0.0
    %206 = vmatpush1.msra.mxu0 %v171
    %207 = vmatprep.subr.mxu0 0.0
    %208 = vmatpush1.msra.mxu0 %v172
    %209 = vmatprep.subr.mxu0 0.0
    %210 = vmatpush1.msra.mxu0 0.0
    %211 = vmatprep.subr.mxu0 0.0
    %212 = vmatpush1.msra.mxu0 0.0
    %213 = vmatprep.subr.mxu0 0.0
    %214 = vmatpush1.msra.mxu0 0.0
    %215 = vmatprep.subr.mxu0 0.0
    %216 = vmatpush1.msra.mxu0 0.0
    %217 = vmatprep.subr.mxu0 0.0
    %218 = vmatpush1.msra.mxu0 0.0
    %219 = vmatprep.subr.mxu0 0.0
    %220 = vmatpush1.msra.mxu0 0.0
    %221 = vmatprep.subr.mxu0 0.0
    %222 = vmatpush1.msra.mxu0 0.0
    %223 = vmatprep.subr.mxu0 0.0
    %224 = vmatpush1.msra.mxu0 0.0
    %225 = vmatprep.subr.mxu0 0.0
    %226 = vmatpush1.msra.mxu0 0.0
    %227 = vmatprep.subr.mxu0 0.0
    %228 = vmatpush1.msra.mxu0 0.0
    %229 = vmatprep.subr.mxu0 0.0
    %230 = vmatpush1.msra.mxu0 0.0
    %231 = vmatprep.subr.mxu0 0.0
    %232 = vmatpush1.msra.mxu0 0.0
    %233 = vmatprep.subr.mxu0 0.0
    %234 = vmatpush1.msra.mxu0 0.0
    %235 = vmatprep.subr.mxu0 0.0
    %236 = vmatpush1.msra.mxu0 0.0
    %237 = vmatprep.subr.mxu0 0.0
    %238 = vmatpush1.msra.mxu0 0.0
    %239 = vmatprep.subr.mxu0 0.0
    %240 = vmatpush1.msra.mxu0 0.0
    %241 = vmatprep.mubr.f32.mxu0 0.0
    %242 = vmatmul.mubr.f32.gmra.mrb[0].mxu0 %v155
    %v243 = vpop.f32.mrb[0].mxu0
    %v244 = vadd.f32 %v176, %v243
    %v245 = vpop.f32.mrb[0].mxu0
    %246 = vdwg.mxu0
    %247 = vst [vmem:[%s4] sm:$0xff] %v244
    %v248 = vlaneseq
    %v249 = vand.u32 %v248, 127
    %vm250 = vcmp.lt.s32.totalorder %v249, 3
    %v251 = vsel %vm250, %v244, -inf
    %252 = vmax.xlane.f32.xlu0 %v251
    %v253 = vpop.xlane.xlu0 %252
    %vm254 = vcmp.eq.f32.partialorder %v251, %v253
    %vm255 = vmand %vm250, %vm254
    %v256 = vsel %vm255, %v249, 128
    %v257 = vand.u32 %v256, 65535
    %v258 = vshra.s32 %v256, 16
    %v259 = vcvt.s32.f32 %v257
    %v260 = vcvt.s32.f32 %v258
    %261 = vmin.xlane.f32.xlu0 %v260
    %v262 = vpop.xlane.xlu0 %261
    %vm263 = vcmp.eq.f32.partialorder %v260, %v262
    %v264 = vsel %vm263, %v259, inf
    %265 = vmin.xlane.f32.xlu0 %v264
    %v266 = vpop.xlane.xlu0 %265
    %v267 = vcvt.f32.s32 %v266
    %v268 = vcvt.f32.s32 %v262
    %v269 = vshll.u32 %v268, 16
    %v270 = vadd.s32 %v269, %v267
    %vm271 = vcmask 7168
    %272 = vst.msk [vmem:[%s6] sm:$0xff] %vm271, %v253
    %273 = vst.msk [vmem:[%s5] sm:$0xff] %vm271, %v270
    // Predicated region
    $region22: #{net_forward.1} parent=1 // pred_check
      _
    $region23: #{net_forward.1} parent=1 // pred_check_branch
      %275 = sbr.rel (0) target = $region25
    $region24: #{net_forward.1} parent=1 // pred_region
      _
    $region25: #{net_forward.1} parent=1 // pred_fallthru
      _
    // Predicated region
    $region26: #{net_forward.1} parent=1 // pred_check
      _
    $region27: #{net_forward.1} parent=1 // pred_check_branch
      %277 = sbr.rel (0) target = $region29
    $region28: #{net_forward.1} parent=1 // pred_region
      _
    $region29: #{net_forward.1} parent=1 // pred_fallthru
      _
    // Predicated region
    $region30: #{net_forward.1} parent=1 // pred_check
      _
    $region31: #{net_forward.1} parent=1 // pred_check_branch
      %279 = sbr.rel (0) target = $region33
    $region32: #{net_forward.1} parent=1 // pred_region
      _
    $region33: #{net_forward.1} parent=1 // pred_fallthru
      _
    // Predicated region
    $region34: #{net_forward.1} parent=1 // pred_check
      _
    $region35: #{net_forward.1} parent=1 // pred_check_branch
      %281 = sbr.rel (0) target = $region37
    $region36: #{net_forward.1} parent=1 // pred_region
      _
    $region37: #{net_forward.1} parent=1 // pred_fallthru
      _
    // Predicated region
    $region38: #{net_forward.1} parent=1 // pred_check
      _
    $region39: #{net_forward.1} parent=1 // pred_check_branch
      %283 = sbr.rel (0) target = $region41
    $region40: #{net_forward.1} parent=1 // pred_region
      _
    $region41: #{net_forward.1} parent=1 // pred_fallthru
      _
    // Predicated region
    $region42: #{net_forward.1} parent=1 // pred_check
      _
    $region43: #{net_forward.1} parent=1 // pred_check_branch
      %285 = sbr.rel (0) target = $region45
    $region44: #{net_forward.1} parent=1 // pred_region
      _
    $region45: #{net_forward.1} parent=1 // pred_fallthru
      _
    %286 = vsyncpa [#allocation3], 1

</llo_original>
